<compile_context>
chip_gen: v5e
topology: v5e:2x2
jax: 0.10.0
libtpu: 0.0.40
codegen_flags: <defaults>
</compile_context>

<pallas_src>
import jax
import jax.numpy as jnp
from jax.experimental import pallas as pl
from jax.experimental.pallas import tpu as pltpu

# ----------------------------- config ---------------------------------------
BATCH = 8            # demo batch (one f32 sublane group)
SEQ = 16             # tokens per example
VOCAB = 64           # synthetic-backbone vocab
EMB = 128            # synthetic-backbone embedding width
BERT_OUT = 3         # "bert logits" width (fc_txt input is 3 in the reference)
HIDDEN_DIM = 256     # reference default 2048, scaled down but lane-dense
HID2 = HIDDEN_DIM // 2               # 128
NUM_LABELS = 4
PAD_LABELS = 128                      # fc2 output padded to a full lane group
BIAS_LEN = HID2 + HIDDEN_DIM + PAD_LABELS   # 512 — packed bias buffer
TM = 8               # batch tile per grid step; raise to 128/256 for serving

assert HID2 == PAD_LABELS, "W_tok and padded fc2 share one 128-lane buffer"


# ----------------------------- kernel ---------------------------------------
def head_kernel(tok_ref, wcat_ref, w1_ref, b_ref, o_ref):
    """token-counts -> (backbone+fc_txt folded) -> relu -> fc1 -> relu -> fc2.

    tok_ref : [TM, SEQ]            int32 token ids (batch tile)
    wcat_ref: [VOCAB + H, 128]     rows 0:VOCAB  = (emb @ w_bert @ wt)/SEQ
                                   rows VOCAB:   = fc2 weight, zero-padded lanes
    w1_ref  : [H/2, H]             fc1 weight
    b_ref   : [1, 512]             packed biases [b0 | b1 | b2_pad]
    o_ref   : [TM, 128]            padded logits
    """
    # ---- token-count matrix (replaces XLA gather + mean pool, VPU only) ----
    vocab_ids = jax.lax.broadcasted_iota(jnp.int32, (TM, VOCAB), 1)
    counts = jnp.zeros((TM, VOCAB), jnp.float32)
    for s in range(SEQ):                              # static unroll
        tok_s = tok_ref[:, s:s + 1]                   # [TM, 1] int32
        counts = counts + jnp.where(tok_s == vocab_ids, 1.0, 0.0)

    # ---- static slices of the packed weight / bias buffers (free) ----------
    w_tok = wcat_ref[0:VOCAB, :]                      # [VOCAB, H/2]
    w2 = wcat_ref[VOCAB:VOCAB + HIDDEN_DIM, :]        # [H, PAD_LABELS]
    b0 = b_ref[:, 0:HID2]
    b1 = b_ref[:, HID2:HID2 + HIDDEN_DIM]
    b2 = b_ref[:, HID2 + HIDDEN_DIM:BIAS_LEN]

    # (embedding-mean + bert-proj + fc_txt) folded, + ReLU
    h0 = jnp.dot(counts, w_tok, preferred_element_type=jnp.float32)
    h0 = jnp.maximum(h0 + b0, 0.0)

    # fc1 + ReLU
    h1 = jnp.dot(h0, w1_ref[...], preferred_element_type=jnp.float32)
    h1 = jnp.maximum(h1 + b1, 0.0)

    # fc2 (lane-padded output -> unmasked stores)
    out = jnp.dot(h1, w2, preferred_element_type=jnp.float32)
    o_ref[...] = (out + b2).astype(o_ref.dtype)


@jax.jit
def head(texts, w_cat, w1, b_all):
    B = texts.shape[0]
    n_tiles = pl.cdiv(B, TM)
    b_pad = n_tiles * TM
    if b_pad != B:
        texts = jnp.pad(texts, ((0, b_pad - B), (0, 0)))
    out = pl.pallas_call(
        head_kernel,
        out_shape=jax.ShapeDtypeStruct((b_pad, PAD_LABELS), jnp.float32),
        grid=(n_tiles,),
        in_specs=[
            pl.BlockSpec((TM, SEQ), lambda i: (i, 0)),                         # texts
            pl.BlockSpec((VOCAB + HIDDEN_DIM, PAD_LABELS), lambda i: (0, 0)),  # w_cat (resident)
            pl.BlockSpec((HID2, HIDDEN_DIM), lambda i: (0, 0)),                # w1    (resident)
            pl.BlockSpec((1, BIAS_LEN), lambda i: (0, 0)),                     # biases(resident)
        ],
        out_specs=pl.BlockSpec((TM, PAD_LABELS), lambda i: (i, 0)),
        compiler_params=pltpu.CompilerParams(
            dimension_semantics=("parallel",),   # both TCs on v7x
        ),
    )(texts, w_cat, w1, b_all)
    return out[:B, :NUM_LABELS]


# --------------------------- parameter init ----------------------------------
def init_linear(key, fan_in, fan_out):
    """PyTorch nn.Linear-style uniform init, stored as [in, out] (pre-transposed)."""
    kw, kb = jax.random.split(key)
    bound = 1.0 / jnp.sqrt(float(fan_in))
    w = jax.random.uniform(kw, (fan_in, fan_out), jnp.float32, -bound, bound)
    b = jax.random.uniform(kb, (1, fan_out), jnp.float32, -bound, bound)
    return w, b


def make_params(key):
    k0, k1, k2, k3, k4 = jax.random.split(key, 5)
    # TODO(synk): a real pretrained BERT encoder has no clean single-kernel
    # Pallas equivalent; a deterministic synthetic backbone (embedding lookup
    # + mean pool + linear to 3 logits) stands in for bert_model.
    emb_table = jax.random.normal(k0, (VOCAB, EMB), jnp.float32) * 0.02
    w_bert, b_bert = init_linear(k1, EMB, BERT_OUT)
    # MLP head (runs in the Pallas kernel)
    wt, bt = init_linear(k2, BERT_OUT, HID2)                 # fc_txt
    w1, b1 = init_linear(k3, HID2, HIDDEN_DIM)               # fc1
    w2, b2 = init_linear(k4, HIDDEN_DIM, NUM_LABELS)         # fc2
    return dict(emb=emb_table, w_bert=w_bert, b_bert=b_bert,
                wt=wt, bt=bt, w1=w1, b1=b1, w2=w2, b2=b2)


def fold_params(p):
    """Precompute kernel-side weights once (outside the hot path).

    Exact folds (everything before the first ReLU is linear):
      mean_s emb[texts] @ w_bert @ wt + (b_bert @ wt + bt)
        == counts(texts) @ [(emb @ w_bert @ wt) / SEQ] + (b_bert @ wt + bt)
    fc2 weight/bias zero-padded to PAD_LABELS lanes; all biases packed into
    one buffer; W_tok and padded fc2 share one 128-lane buffer (fewer DMAs).
    """
    w_tok = (p["emb"] @ p["w_bert"] @ p["wt"]) / float(SEQ)   # [VOCAB, H/2]
    b0 = p["b_bert"] @ p["wt"] + p["bt"]                      # [1, H/2]
    w2p = jnp.zeros((HIDDEN_DIM, PAD_LABELS), jnp.float32)
    w2p = w2p.at[:, :NUM_LABELS].set(p["w2"])
    b2p = jnp.zeros((1, PAD_LABELS), jnp.float32)
    b2p = b2p.at[:, :NUM_LABELS].set(p["b2"])
    w_cat = jnp.concatenate([w_tok, w2p], axis=0)             # [VOCAB+H, 128]
    b_all = jnp.concatenate([b0, p["b1"], b2p], axis=1)       # [1, 512]
    return dict(w_cat=w_cat, w1=p["w1"], b_all=b_all)


# ------------------------------ forward --------------------------------------
def forward(folded, texts):
    # The whole forward pass (synthetic backbone + MLP head) is ONE kernel.
    return head(texts, folded["w_cat"], folded["w1"], folded["b_all"])


def forward_ref(params, texts):
    """Pure-JAX reference following the original (unfolded) module structure."""
    tok_emb = params["emb"][texts]                            # [B, S, EMB]
    pooled = jnp.mean(tok_emb, axis=1)                        # [B, EMB]
    x = pooled @ params["w_bert"] + params["b_bert"]          # bert logits [B, 3]
    h0 = jnp.maximum(x @ params["wt"] + params["bt"], 0.0)    # fc_txt + relu
    h1 = jnp.maximum(h0 @ params["w1"] + params["b1"], 0.0)   # fc1 + relu
    return h1 @ params["w2"] + params["b2"]                   # fc2


# -------------------------------- main ---------------------------------------
if __name__ == "__main__":
    key = jax.random.PRNGKey(0)
    kp, kt = jax.random.split(key)
    params = make_params(kp)
    folded = fold_params(params)
    texts = jax.random.randint(kt, (BATCH, SEQ), 0, VOCAB, dtype=jnp.int32)

    out = jax.block_until_ready(forward(folded, texts))
    ref = jax.block_until_ready(forward_ref(params, texts))

    assert out.shape == (BATCH, NUM_LABELS), out.shape
    assert jnp.allclose(out, ref, atol=1e-4, rtol=1e-4), "mismatch vs reference"

    print("KERNEL_OK")
</pallas_src>

<mosaic_0001>
module attributes {stable_mosaic.version = 11 : i64} {
  func.func @head_kernel(%arg0: i32, %arg1: memref<8x16xi32, #tpu.memory_space<vmem>>, %arg2: memref<320x128xf32, #tpu.memory_space<vmem>>, %arg3: memref<128x256xf32, #tpu.memory_space<vmem>>, %arg4: memref<1x512xf32, #tpu.memory_space<vmem>>, %arg5: memref<8x128xf32, #tpu.memory_space<vmem>>) attributes {dimension_semantics = [#tpu.dimension_semantics<parallel>], iteration_bounds = array<i64: 1>, scalar_prefetch = 0 : i64, scratch_operands = 0 : i64, tpu.core_type = #tpu.core_type<tc>, window_params = [{transform_indices = @transform_0, window_bounds = array<i64: 8, 16>}, {pipeline_mode = #tpu.pipeline_mode<synchronous>, transform_indices = @transform_1, window_bounds = array<i64: 320, 128>}, {pipeline_mode = #tpu.pipeline_mode<synchronous>, transform_indices = @transform_2, window_bounds = array<i64: 128, 256>}, {pipeline_mode = #tpu.pipeline_mode<synchronous>, transform_indices = @transform_3, window_bounds = array<i64: 1, 512>}, {transform_indices = @transform_4, window_bounds = array<i64: 8, 128>}]} {
    %0 = tpu.iota {dimensions = array<i32: 1>} : vector<8x64xi32>
    %cst = arith.constant 0.000000e+00 : f32
    %1 = vector.broadcast %cst : f32 to vector<8x64xf32>
    %c0 = arith.constant 0 : index
    %c0_0 = arith.constant 0 : index
    %2 = vector.load %arg1[%c0, %c0_0] : memref<8x16xi32, #tpu.memory_space<vmem>>, vector<8x1xi32>
    %3 = vector.broadcast %2 : vector<8x1xi32> to vector<8x64xi32>
    %4 = arith.cmpi eq, %3, %0 : vector<8x64xi32>
    %cst_1 = arith.constant 1.000000e+00 : f32
    %cst_2 = arith.constant 0.000000e+00 : f32
    %5 = vector.broadcast %cst_1 : f32 to vector<8x64xf32>
    %6 = vector.broadcast %cst_2 : f32 to vector<8x64xf32>
    %7 = arith.select %4, %5, %6 : vector<8x64xi1>, vector<8x64xf32>
    %8 = arith.addf %1, %7 : vector<8x64xf32>
    %c0_3 = arith.constant 0 : index
    %c1 = arith.constant 1 : index
    %9 = vector.load %arg1[%c0_3, %c1] : memref<8x16xi32, #tpu.memory_space<vmem>>, vector<8x1xi32>
    %10 = vector.broadcast %9 : vector<8x1xi32> to vector<8x64xi32>
    %11 = arith.cmpi eq, %10, %0 : vector<8x64xi32>
    %cst_4 = arith.constant 1.000000e+00 : f32
    %cst_5 = arith.constant 0.000000e+00 : f32
    %12 = vector.broadcast %cst_4 : f32 to vector<8x64xf32>
    %13 = vector.broadcast %cst_5 : f32 to vector<8x64xf32>
    %14 = arith.select %11, %12, %13 : vector<8x64xi1>, vector<8x64xf32>
    %15 = arith.addf %8, %14 : vector<8x64xf32>
    %c0_6 = arith.constant 0 : index
    %c2 = arith.constant 2 : index
    %16 = vector.load %arg1[%c0_6, %c2] : memref<8x16xi32, #tpu.memory_space<vmem>>, vector<8x1xi32>
    %17 = vector.broadcast %16 : vector<8x1xi32> to vector<8x64xi32>
    %18 = arith.cmpi eq, %17, %0 : vector<8x64xi32>
    %cst_7 = arith.constant 1.000000e+00 : f32
    %cst_8 = arith.constant 0.000000e+00 : f32
    %19 = vector.broadcast %cst_7 : f32 to vector<8x64xf32>
    %20 = vector.broadcast %cst_8 : f32 to vector<8x64xf32>
    %21 = arith.select %18, %19, %20 : vector<8x64xi1>, vector<8x64xf32>
    %22 = arith.addf %15, %21 : vector<8x64xf32>
    %c0_9 = arith.constant 0 : index
    %c3 = arith.constant 3 : index
    %23 = vector.load %arg1[%c0_9, %c3] : memref<8x16xi32, #tpu.memory_space<vmem>>, vector<8x1xi32>
    %24 = vector.broadcast %23 : vector<8x1xi32> to vector<8x64xi32>
    %25 = arith.cmpi eq, %24, %0 : vector<8x64xi32>
    %cst_10 = arith.constant 1.000000e+00 : f32
    %cst_11 = arith.constant 0.000000e+00 : f32
    %26 = vector.broadcast %cst_10 : f32 to vector<8x64xf32>
    %27 = vector.broadcast %cst_11 : f32 to vector<8x64xf32>
    %28 = arith.select %25, %26, %27 : vector<8x64xi1>, vector<8x64xf32>
    %29 = arith.addf %22, %28 : vector<8x64xf32>
    %c0_12 = arith.constant 0 : index
    %c4 = arith.constant 4 : index
    %30 = vector.load %arg1[%c0_12, %c4] : memref<8x16xi32, #tpu.memory_space<vmem>>, vector<8x1xi32>
    %31 = vector.broadcast %30 : vector<8x1xi32> to vector<8x64xi32>
    %32 = arith.cmpi eq, %31, %0 : vector<8x64xi32>
    %cst_13 = arith.constant 1.000000e+00 : f32
    %cst_14 = arith.constant 0.000000e+00 : f32
    %33 = vector.broadcast %cst_13 : f32 to vector<8x64xf32>
    %34 = vector.broadcast %cst_14 : f32 to vector<8x64xf32>
    %35 = arith.select %32, %33, %34 : vector<8x64xi1>, vector<8x64xf32>
    %36 = arith.addf %29, %35 : vector<8x64xf32>
    %c0_15 = arith.constant 0 : index
    %c5 = arith.constant 5 : index
    %37 = vector.load %arg1[%c0_15, %c5] : memref<8x16xi32, #tpu.memory_space<vmem>>, vector<8x1xi32>
    %38 = vector.broadcast %37 : vector<8x1xi32> to vector<8x64xi32>
    %39 = arith.cmpi eq, %38, %0 : vector<8x64xi32>
    %cst_16 = arith.constant 1.000000e+00 : f32
    %cst_17 = arith.constant 0.000000e+00 : f32
    %40 = vector.broadcast %cst_16 : f32 to vector<8x64xf32>
    %41 = vector.broadcast %cst_17 : f32 to vector<8x64xf32>
    %42 = arith.select %39, %40, %41 : vector<8x64xi1>, vector<8x64xf32>
    %43 = arith.addf %36, %42 : vector<8x64xf32>
    %c0_18 = arith.constant 0 : index
    %c6 = arith.constant 6 : index
    %44 = vector.load %arg1[%c0_18, %c6] : memref<8x16xi32, #tpu.memory_space<vmem>>, vector<8x1xi32>
    %45 = vector.broadcast %44 : vector<8x1xi32> to vector<8x64xi32>
    %46 = arith.cmpi eq, %45, %0 : vector<8x64xi32>
    %cst_19 = arith.constant 1.000000e+00 : f32
    %cst_20 = arith.constant 0.000000e+00 : f32
    %47 = vector.broadcast %cst_19 : f32 to vector<8x64xf32>
    %48 = vector.broadcast %cst_20 : f32 to vector<8x64xf32>
    %49 = arith.select %46, %47, %48 : vector<8x64xi1>, vector<8x64xf32>
    %50 = arith.addf %43, %49 : vector<8x64xf32>
    %c0_21 = arith.constant 0 : index
    %c7 = arith.constant 7 : index
    %51 = vector.load %arg1[%c0_21, %c7] : memref<8x16xi32, #tpu.memory_space<vmem>>, vector<8x1xi32>
    %52 = vector.broadcast %51 : vector<8x1xi32> to vector<8x64xi32>
    %53 = arith.cmpi eq, %52, %0 : vector<8x64xi32>
    %cst_22 = arith.constant 1.000000e+00 : f32
    %cst_23 = arith.constant 0.000000e+00 : f32
    %54 = vector.broadcast %cst_22 : f32 to vector<8x64xf32>
    %55 = vector.broadcast %cst_23 : f32 to vector<8x64xf32>
    %56 = arith.select %53, %54, %55 : vector<8x64xi1>, vector<8x64xf32>
    %57 = arith.addf %50, %56 : vector<8x64xf32>
    %c0_24 = arith.constant 0 : index
    %c8 = arith.constant 8 : index
    %58 = vector.load %arg1[%c0_24, %c8] : memref<8x16xi32, #tpu.memory_space<vmem>>, vector<8x1xi32>
    %59 = vector.broadcast %58 : vector<8x1xi32> to vector<8x64xi32>
    %60 = arith.cmpi eq, %59, %0 : vector<8x64xi32>
    %cst_25 = arith.constant 1.000000e+00 : f32
    %cst_26 = arith.constant 0.000000e+00 : f32
    %61 = vector.broadcast %cst_25 : f32 to vector<8x64xf32>
    %62 = vector.broadcast %cst_26 : f32 to vector<8x64xf32>
    %63 = arith.select %60, %61, %62 : vector<8x64xi1>, vector<8x64xf32>
    %64 = arith.addf %57, %63 : vector<8x64xf32>
    %c0_27 = arith.constant 0 : index
    %c9 = arith.constant 9 : index
    %65 = vector.load %arg1[%c0_27, %c9] : memref<8x16xi32, #tpu.memory_space<vmem>>, vector<8x1xi32>
    %66 = vector.broadcast %65 : vector<8x1xi32> to vector<8x64xi32>
    %67 = arith.cmpi eq, %66, %0 : vector<8x64xi32>
    %cst_28 = arith.constant 1.000000e+00 : f32
    %cst_29 = arith.constant 0.000000e+00 : f32
    %68 = vector.broadcast %cst_28 : f32 to vector<8x64xf32>
    %69 = vector.broadcast %cst_29 : f32 to vector<8x64xf32>
    %70 = arith.select %67, %68, %69 : vector<8x64xi1>, vector<8x64xf32>
    %71 = arith.addf %64, %70 : vector<8x64xf32>
    %c0_30 = arith.constant 0 : index
    %c10 = arith.constant 10 : index
    %72 = vector.load %arg1[%c0_30, %c10] : memref<8x16xi32, #tpu.memory_space<vmem>>, vector<8x1xi32>
    %73 = vector.broadcast %72 : vector<8x1xi32> to vector<8x64xi32>
    %74 = arith.cmpi eq, %73, %0 : vector<8x64xi32>
    %cst_31 = arith.constant 1.000000e+00 : f32
    %cst_32 = arith.constant 0.000000e+00 : f32
    %75 = vector.broadcast %cst_31 : f32 to vector<8x64xf32>
    %76 = vector.broadcast %cst_32 : f32 to vector<8x64xf32>
    %77 = arith.select %74, %75, %76 : vector<8x64xi1>, vector<8x64xf32>
    %78 = arith.addf %71, %77 : vector<8x64xf32>
    %c0_33 = arith.constant 0 : index
    %c11 = arith.constant 11 : index
    %79 = vector.load %arg1[%c0_33, %c11] : memref<8x16xi32, #tpu.memory_space<vmem>>, vector<8x1xi32>
    %80 = vector.broadcast %79 : vector<8x1xi32> to vector<8x64xi32>
    %81 = arith.cmpi eq, %80, %0 : vector<8x64xi32>
    %cst_34 = arith.constant 1.000000e+00 : f32
    %cst_35 = arith.constant 0.000000e+00 : f32
    %82 = vector.broadcast %cst_34 : f32 to vector<8x64xf32>
    %83 = vector.broadcast %cst_35 : f32 to vector<8x64xf32>
    %84 = arith.select %81, %82, %83 : vector<8x64xi1>, vector<8x64xf32>
    %85 = arith.addf %78, %84 : vector<8x64xf32>
    %c0_36 = arith.constant 0 : index
    %c12 = arith.constant 12 : index
    %86 = vector.load %arg1[%c0_36, %c12] : memref<8x16xi32, #tpu.memory_space<vmem>>, vector<8x1xi32>
    %87 = vector.broadcast %86 : vector<8x1xi32> to vector<8x64xi32>
    %88 = arith.cmpi eq, %87, %0 : vector<8x64xi32>
    %cst_37 = arith.constant 1.000000e+00 : f32
    %cst_38 = arith.constant 0.000000e+00 : f32
    %89 = vector.broadcast %cst_37 : f32 to vector<8x64xf32>
    %90 = vector.broadcast %cst_38 : f32 to vector<8x64xf32>
    %91 = arith.select %88, %89, %90 : vector<8x64xi1>, vector<8x64xf32>
    %92 = arith.addf %85, %91 : vector<8x64xf32>
    %c0_39 = arith.constant 0 : index
    %c13 = arith.constant 13 : index
    %93 = vector.load %arg1[%c0_39, %c13] : memref<8x16xi32, #tpu.memory_space<vmem>>, vector<8x1xi32>
    %94 = vector.broadcast %93 : vector<8x1xi32> to vector<8x64xi32>
    %95 = arith.cmpi eq, %94, %0 : vector<8x64xi32>
    %cst_40 = arith.constant 1.000000e+00 : f32
    %cst_41 = arith.constant 0.000000e+00 : f32
    %96 = vector.broadcast %cst_40 : f32 to vector<8x64xf32>
    %97 = vector.broadcast %cst_41 : f32 to vector<8x64xf32>
    %98 = arith.select %95, %96, %97 : vector<8x64xi1>, vector<8x64xf32>
    %99 = arith.addf %92, %98 : vector<8x64xf32>
    %c0_42 = arith.constant 0 : index
    %c14 = arith.constant 14 : index
    %100 = vector.load %arg1[%c0_42, %c14] : memref<8x16xi32, #tpu.memory_space<vmem>>, vector<8x1xi32>
    %101 = vector.broadcast %100 : vector<8x1xi32> to vector<8x64xi32>
    %102 = arith.cmpi eq, %101, %0 : vector<8x64xi32>
    %cst_43 = arith.constant 1.000000e+00 : f32
    %cst_44 = arith.constant 0.000000e+00 : f32
    %103 = vector.broadcast %cst_43 : f32 to vector<8x64xf32>
    %104 = vector.broadcast %cst_44 : f32 to vector<8x64xf32>
    %105 = arith.select %102, %103, %104 : vector<8x64xi1>, vector<8x64xf32>
    %106 = arith.addf %99, %105 : vector<8x64xf32>
    %c0_45 = arith.constant 0 : index
    %c15 = arith.constant 15 : index
    %107 = vector.load %arg1[%c0_45, %c15] : memref<8x16xi32, #tpu.memory_space<vmem>>, vector<8x1xi32>
    %108 = vector.broadcast %107 : vector<8x1xi32> to vector<8x64xi32>
    %109 = arith.cmpi eq, %108, %0 : vector<8x64xi32>
    %cst_46 = arith.constant 1.000000e+00 : f32
    %cst_47 = arith.constant 0.000000e+00 : f32
    %110 = vector.broadcast %cst_46 : f32 to vector<8x64xf32>
    %111 = vector.broadcast %cst_47 : f32 to vector<8x64xf32>
    %112 = arith.select %109, %110, %111 : vector<8x64xi1>, vector<8x64xf32>
    %113 = arith.addf %106, %112 : vector<8x64xf32>
    %c0_48 = arith.constant 0 : index
    %c0_49 = arith.constant 0 : index
    %114 = vector.load %arg2[%c0_48, %c0_49] : memref<320x128xf32, #tpu.memory_space<vmem>>, vector<64x128xf32>
    %c64 = arith.constant 64 : index
    %c0_50 = arith.constant 0 : index
    %115 = vector.load %arg2[%c64, %c0_50] : memref<320x128xf32, #tpu.memory_space<vmem>>, vector<256x128xf32>
    %c0_51 = arith.constant 0 : index
    %c0_52 = arith.constant 0 : index
    %116 = vector.load %arg4[%c0_51, %c0_52] : memref<1x512xf32, #tpu.memory_space<vmem>>, vector<1x128xf32>
    %c0_53 = arith.constant 0 : index
    %c128 = arith.constant 128 : index
    %117 = vector.load %arg4[%c0_53, %c128] : memref<1x512xf32, #tpu.memory_space<vmem>>, vector<1x256xf32>
    %c0_54 = arith.constant 0 : index
    %c384 = arith.constant 384 : index
    %118 = vector.load %arg4[%c0_54, %c384] : memref<1x512xf32, #tpu.memory_space<vmem>>, vector<1x128xf32>
    %cst_55 = arith.constant dense<0.000000e+00> : vector<8x128xf32>
    %119 = tpu.matmul %113, %114, %cst_55 {dimension_numbers = #tpu.dot_dimension_numbers<[1], [0], [0], [1], [0, 0, 1, 1], [], []>} : vector<8x64xf32>, vector<64x128xf32>, vector<8x128xf32> -> vector<8x128xf32>
    %120 = vector.broadcast %116 : vector<1x128xf32> to vector<8x128xf32>
    %121 = arith.addf %119, %120 : vector<8x128xf32>
    %cst_56 = arith.constant 0.000000e+00 : f32
    %122 = vector.broadcast %cst_56 : f32 to vector<8x128xf32>
    %123 = arith.maximumf %121, %122 : vector<8x128xf32>
    %c0_57 = arith.constant 0 : index
    %c0_58 = arith.constant 0 : index
    %124 = vector.load %arg3[%c0_57, %c0_58] : memref<128x256xf32, #tpu.memory_space<vmem>>, vector<128x256xf32>
    %cst_59 = arith.constant dense<0.000000e+00> : vector<8x256xf32>
    %125 = tpu.matmul %123, %124, %cst_59 {dimension_numbers = #tpu.dot_dimension_numbers<[1], [0], [0], [1], [0, 0, 1, 1], [], []>} : vector<8x128xf32>, vector<128x256xf32>, vector<8x256xf32> -> vector<8x256xf32>
    %126 = vector.broadcast %117 : vector<1x256xf32> to vector<8x256xf32>
    %127 = arith.addf %125, %126 : vector<8x256xf32>
    %cst_60 = arith.constant 0.000000e+00 : f32
    %128 = vector.broadcast %cst_60 : f32 to vector<8x256xf32>
    %129 = arith.maximumf %127, %128 : vector<8x256xf32>
    %cst_61 = arith.constant dense<0.000000e+00> : vector<8x128xf32>
    %130 = tpu.matmul %129, %115, %cst_61 {dimension_numbers = #tpu.dot_dimension_numbers<[1], [0], [0], [1], [0, 0, 1, 1], [], []>} : vector<8x256xf32>, vector<256x128xf32>, vector<8x128xf32> -> vector<8x128xf32>
    %131 = vector.broadcast %118 : vector<1x128xf32> to vector<8x128xf32>
    %132 = arith.addf %130, %131 : vector<8x128xf32>
    %c0_62 = arith.constant 0 : index
    %c0_63 = arith.constant 0 : index
    %133 = vector.load %arg5[%c0_62, %c0_63] : memref<8x128xf32, #tpu.memory_space<vmem>>, vector<8x128xf32>
    tpu.vector_store %arg5[%c0_62, %c0_63], %132 {strides = array<i32>} : memref<8x128xf32, #tpu.memory_space<vmem>>, vector<8x128xf32>,
    return
  }
  func.func @transform_0(%arg0: i32) -> (i32, i32) {
    %c0_i32 = arith.constant 0 : i32
    %c0_i32_0 = arith.constant 0 : i32
    return %arg0, %c0_i32 : i32, i32
  }
  func.func @transform_1(%arg0: i32) -> (i32, i32) {
    %c0_i32 = arith.constant 0 : i32
    %c0_i32_0 = arith.constant 0 : i32
    %c0_i32_1 = arith.constant 0 : i32
    return %c0_i32, %c0_i32_0 : i32, i32
  }
  func.func @transform_2(%arg0: i32) -> (i32, i32) {
    %c0_i32 = arith.constant 0 : i32
    %c0_i32_0 = arith.constant 0 : i32
    %c0_i32_1 = arith.constant 0 : i32
    return %c0_i32, %c0_i32_0 : i32, i32
  }
  func.func @transform_3(%arg0: i32) -> (i32, i32) {
    %c0_i32 = arith.constant 0 : i32
    %c0_i32_0 = arith.constant 0 : i32
    %c0_i32_1 = arith.constant 0 : i32
    return %c0_i32, %c0_i32_0 : i32, i32
  }
  func.func @transform_4(%arg0: i32) -> (i32, i32) {
    %c0_i32 = arith.constant 0 : i32
    %c0_i32_0 = arith.constant 0 : i32
    return %arg0, %c0_i32 : i32, i32
  }
}

</mosaic_0001>

<llo_original>
// kernel: head.1
$region0: #{head.1}
  #allocation0 [shape = 'u32[]', space=smem, size = 0x4, offset = 0x4, fixed_abs, tag = 'smem constant byte address 0x4 - core index']
  #allocation1 [shape = 'u32[72,128]{1,0:T(1,128)}', space=vmem, size = 0x9000, scoped, tag = 'internal scratch']
  %s0 = inlined_call_operand.hbm [shape: s32[8,16], index: 0, kind: input, shape index: {}]
  %s1 = inlined_call_operand.hbm [shape: f32[320,128], index: 1, kind: input, shape index: {}]
  %s2 = inlined_call_operand.hbm [shape: f32[128,256], index: 2, kind: input, shape index: {}]
  %s3 = inlined_call_operand.hbm [shape: f32[1,512], index: 3, kind: input, shape index: {}]
  %s4 = inlined_call_operand.vmem [shape: f32[8,128], index: 4, kind: output, shape index: {}]
  %s5 = sld [smem:[#allocation0]]
  $region42: #{head.1} parent=0
    _
  %s7 = ssub.s32 1, %s5
  %s8 = scalar_select 0, %s7, %s5
  $region1: #{head.1} parent=0
    #allocation2 [shape = 'u8[4096]{0}', space=vmem, size = 0x1000, scoped, tag = 'input window, operand 0, single buffered']
    #allocation3 [shape = 's32[1]{0}', space=sflag, size = 0x4, scoped, tag = 'scoped memory for head.1']
    #allocation4 [shape = 'u8[163840]{0}', space=vmem, size = 0x28000, scoped, tag = 'input window, operand 1, single buffered']
    #allocation5 [shape = 's32[1]{0}', space=sflag, size = 0x4, scoped, tag = 'scoped memory for head.1']
    #allocation6 [shape = 'u8[131072]{0}', space=vmem, size = 0x20000, scoped, tag = 'input window, operand 2, single buffered']
    #allocation7 [shape = 'u8[2048]{0}', space=vmem, size = 0x800, scoped, tag = 'input window, operand 3, single buffered']
    #allocation8 [shape = 's32[1]{0}', space=sflag, size = 0x4, scoped, tag = 'scoped memory for head.1']
    %9 = vsyncpa [#allocation3], 0
    %10 = vsyncpa [#allocation5], 0
    %11 = vsyncpa [#allocation8], 0
    // Predicated region
    $region2: #{head.1} parent=1 // pred_check
      _
    $region3: #{head.1} parent=1 // pred_check_branch
      %13 = sbr.rel (0) target = $region5
    $region4: #{head.1} parent=1 // pred_region
      %15 = vsyncadd [#allocation3], 0
      %s17 = sshll.u32 %s0, 4
      %s18 = int_to_ptr.hbm [resolvable:$true] %s17
      %s19 = sshll.u32 [#allocation2], 4
      %s20 = int_to_ptr.vmem [resolvable:$true] %s19
      %22 = dma.hbm_to_vmem [thread:$0]  %s18, 128, %s20, [#allocation3]
    $region5: #{head.1} parent=1 // pred_fallthru
      _
    // Predicated region
    $region6: #{head.1} parent=1 // pred_check
      _
    $region7: #{head.1} parent=1 // pred_check_branch
      %24 = sbr.rel (0) target = $region9
    $region8: #{head.1} parent=1 // pred_region
      %26 = vsyncadd [#allocation5], 0
      %s27 = sshll.u32 %s1, 4
      %s28 = int_to_ptr.hbm [resolvable:$true] %s27
      %s29 = sshll.u32 [#allocation4], 4
      %s30 = int_to_ptr.vmem [resolvable:$true] %s29
      %35 = dma.hbm_to_vmem [thread:$0]  %s28, 5120, %s30, [#allocation5], 128, 128, 8
    $region9: #{head.1} parent=1 // pred_fallthru
      _
    // Predicated region
    $region10: #{head.1} parent=1 // pred_check
      _
    $region11: #{head.1} parent=1 // pred_check_branch
      %37 = sbr.rel (0) target = $region13
    $region12: #{head.1} parent=1 // pred_region
      %39 = vsyncadd [#allocation5], 0
      %s40 = sshll.u32 %s2, 4
      %s41 = int_to_ptr.hbm [resolvable:$true] %s40
      %s42 = sshll.u32 [#allocation6], 4
      %s43 = int_to_ptr.vmem [resolvable:$true] %s42
      %48 = dma.hbm_to_vmem [thread:$0]  %s41, 4096, %s43, [#allocation5], 256, 256, 16
    $region13: #{head.1} parent=1 // pred_fallthru
      _
    // Predicated region
    $region14: #{head.1} parent=1 // pred_check
      _
    $region15: #{head.1} parent=1 // pred_check_branch
      %50 = sbr.rel (0) target = $region17
    $region16: #{head.1} parent=1 // pred_region
      %52 = vsyncadd [#allocation8], 0
      %s54 = sshll.u32 %s3, 4
      %s55 = int_to_ptr.hbm [resolvable:$true] %s54
      %s56 = sshll.u32 [#allocation7], 4
      %s57 = int_to_ptr.vmem [resolvable:$true] %s56
      %59 = dma.hbm_to_vmem [thread:$0]  %s55, 64, %s57, [#allocation8]
    $region17: #{head.1} parent=1 // pred_fallthru
      _
    // Predicated region
    $region18: #{head.1} parent=1 // pred_check
      _
    $region19: #{head.1} parent=1 // pred_check_branch
      %61 = sbr.rel (0) target = $region21
    $region20: #{head.1} parent=1 // pred_region
      %63 = dma.done [#allocation3], 128
    $region21: #{head.1} parent=1 // pred_fallthru
      _
    // Predicated region
    $region22: #{head.1} parent=1 // pred_check
      _
    $region23: #{head.1} parent=1 // pred_check_branch
      %65 = sbr.rel (0) target = $region25
    $region24: #{head.1} parent=1 // pred_region
      %67 = dma.done [#allocation5], 5120
    $region25: #{head.1} parent=1 // pred_fallthru
      _
    // Predicated region
    $region26: #{head.1} parent=1 // pred_check
      _
    $region27: #{head.1} parent=1 // pred_check_branch
      %69 = sbr.rel (0) target = $region29
    $region28: #{head.1} parent=1 // pred_region
      %71 = dma.done [#allocation5], 4096
    $region29: #{head.1} parent=1 // pred_fallthru
      _
    // Predicated region
    $region30: #{head.1} parent=1 // pred_check
      _
    $region31: #{head.1} parent=1 // pred_check_branch
      %73 = sbr.rel (0) target = $region33
    $region32: #{head.1} parent=1 // pred_region
      %75 = dma.done [#allocation8], 64
    $region33: #{head.1} parent=1 // pred_fallthru
      _
    %v76 = vlaneseq
    %v77 = vand.u32 %v76, 127
    %v78 = vld [vmem:[#allocation2] sm:$0xff]
    %79 = vset.pattern.permute.xlu0 0
    %80 = vperm.xlu0 %79, %v78
    %v81 = vpop.permute.xlu0 %80
    %vm82 = vcmp.eq.s32.totalorder %v81, %v77
    %v83 = vsel %vm82, 1.0, 0.0
    %v84 = vadd.f32 %v83, 0.0
    %85 = vset.pattern.permute.xlu0 1
    %86 = vperm.xlu0 %85, %v78
    %v87 = vpop.permute.xlu0 %86
    %vm88 = vcmp.eq.s32.totalorder %v87, %v77
    %v89 = vsel %vm88, 1.0, 0.0
    %v90 = vadd.f32 %v84, %v89
    %91 = vset.pattern.permute.xlu0 2
    %92 = vperm.xlu0 %91, %v78
    %v93 = vpop.permute.xlu0 %92
    %vm94 = vcmp.eq.s32.totalorder %v93, %v77
    %v95 = vsel %vm94, 1.0, 0.0
    %v96 = vadd.f32 %v90, %v95
    %97 = vset.pattern.permute.xlu0 3
    %98 = vperm.xlu0 %97, %v78
    %v99 = vpop.permute.xlu0 %98
    %vm100 = vcmp.eq.s32.totalorder %v99, %v77
    %v101 = vsel %vm100, 1.0, 0.0
    %v102 = vadd.f32 %v96, %v101
    %103 = vset.pattern.permute.xlu0 4
    %104 = vperm.xlu0 %103, %v78
    %v105 = vpop.permute.xlu0 %104
    %vm106 = vcmp.eq.s32.totalorder %v105, %v77
    %v107 = vsel %vm106, 1.0, 0.0
    %v108 = vadd.f32 %v102, %v107
    %109 = vset.pattern.permute.xlu0 5
    %110 = vperm.xlu0 %109, %v78
    %v111 = vpop.permute.xlu0 %110
    %vm112 = vcmp.eq.s32.totalorder %v111, %v77
    %v113 = vsel %vm112, 1.0, 0.0
    %v114 = vadd.f32 %v108, %v113
    %115 = vset.pattern.permute.xlu0 6
    %116 = vperm.xlu0 %115, %v78
    %v117 = vpop.permute.xlu0 %116
    %vm118 = vcmp.eq.s32.totalorder %v117, %v77
    %v119 = vsel %vm118, 1.0, 0.0
    %v120 = vadd.f32 %v114, %v119
    %121 = vset.pattern.permute.xlu0 7
    %122 = vperm.xlu0 %121, %v78
    %v123 = vpop.permute.xlu0 %122
    %vm124 = vcmp.eq.s32.totalorder %v123, %v77
    %v125 = vsel %vm124, 1.0, 0.0
    %v126 = vadd.f32 %v120, %v125
    %127 = vset.pattern.permute.xlu0 8
    %128 = vperm.xlu0 %127, %v78
    %v129 = vpop.permute.xlu0 %128
    %vm130 = vcmp.eq.s32.totalorder %v129, %v77
    %v131 = vsel %vm130, 1.0, 0.0
    %v132 = vadd.f32 %v126, %v131
    %133 = vset.pattern.permute.xlu0 9
    %134 = vperm.xlu0 %133, %v78
    %v135 = vpop.permute.xlu0 %134
    %vm136 = vcmp.eq.s32.totalorder %v135, %v77
    %v137 = vsel %vm136, 1.0, 0.0
    %v138 = vadd.f32 %v132, %v137
    %139 = vset.pattern.permute.xlu0 10
    %140 = vperm.xlu0 %139, %v78
    %v141 = vpop.permute.xlu0 %140
    %vm142 = vcmp.eq.s32.totalorder %v141, %v77
    %v143 = vsel %vm142, 1.0, 0.0
    %v144 = vadd.f32 %v138, %v143
    %145 = vset.pattern.permute.xlu0 11
    %146 = vperm.xlu0 %145, %v78
    %v147 = vpop.permute.xlu0 %146
    %vm148 = vcmp.eq.s32.totalorder %v147, %v77
    %v149 = vsel %vm148, 1.0, 0.0
    %v150 = vadd.f32 %v144, %v149
    %151 = vset.pattern.permute.xlu0 12
    %152 = vperm.xlu0 %151, %v78
    %v153 = vpop.permute.xlu0 %152
    %vm154 = vcmp.eq.s32.totalorder %v153, %v77
    %v155 = vsel %vm154, 1.0, 0.0
    %v156 = vadd.f32 %v150, %v155
    %157 = vset.pattern.permute.xlu0 13
    %158 = vperm.xlu0 %157, %v78
    %v159 = vpop.permute.xlu0 %158
    %vm160 = vcmp.eq.s32.totalorder %v159, %v77
    %v161 = vsel %vm160, 1.0, 0.0
    %v162 = vadd.f32 %v156, %v161
    %163 = vset.pattern.permute.xlu0 14
    %164 = vperm.xlu0 %163, %v78
    %v165 = vpop.permute.xlu0 %164
    %vm166 = vcmp.eq.s32.totalorder %v165, %v77
    %v167 = vsel %vm166, 1.0, 0.0
    %v168 = vadd.f32 %v162, %v167
    %169 = vset.pattern.permute.xlu0 15
    %170 = vperm.xlu0 %169, %v78
    %v171 = vpop.permute.xlu0 %170
    %vm172 = vcmp.eq.s32.totalorder %v171, %v77
    %v173 = vsel %vm172, 1.0, 0.0
    %v174 = vadd.f32 %v168, %v173
    %v175 = vld [vmem:[#allocation4] sm:$0xff]
    %v176 = vld [vmem:[#allocation4 + $0x8] sm:$0xff]
    %v177 = vld [vmem:[#allocation4 + $0x10] sm:$0xff]
    %v178 = vld [vmem:[#allocation4 + $0x18] sm:$0xff]
    %v179 = vld [vmem:[#allocation4 + $0x20] sm:$0xff]
    %v180 = vld [vmem:[#allocation4 + $0x28] sm:$0xff]
    %v181 = vld [vmem:[#allocation4 + $0x30] sm:$0xff]
    %v182 = vld [vmem:[#allocation4 + $0x38] sm:$0xff]
    %v183 = vld [vmem:[#allocation4 + $0x40] sm:$0xff]
    %v184 = vld [vmem:[#allocation4 + $0x48] sm:$0xff]
    %v185 = vld [vmem:[#allocation4 + $0x50] sm:$0xff]
    %v186 = vld [vmem:[#allocation4 + $0x58] sm:$0xff]
    %v187 = vld [vmem:[#allocation4 + $0x60] sm:$0xff]
    %v188 = vld [vmem:[#allocation4 + $0x68] sm:$0xff]
    %v189 = vld [vmem:[#allocation4 + $0x70] sm:$0xff]
    %v190 = vld [vmem:[#allocation4 + $0x78] sm:$0xff]
    %v191 = vld [vmem:[#allocation4 + $0x80] sm:$0xff]
    %v192 = vld [vmem:[#allocation4 + $0x88] sm:$0xff]
    %v193 = vld [vmem:[#allocation4 + $0x90] sm:$0xff]
    %v194 = vld [vmem:[#allocation4 + $0x98] sm:$0xff]
    %v195 = vld [vmem:[#allocation4 + $0xa0] sm:$0xff]
    %v196 = vld [vmem:[#allocation4 + $0xa8] sm:$0xff]
    %v197 = vld [vmem:[#allocation4 + $0xb0] sm:$0xff]
    %v198 = vld [vmem:[#allocation4 + $0xb8] sm:$0xff]
    %v199 = vld [vmem:[#allocation4 + $0xc0] sm:$0xff]
    %v200 = vld [vmem:[#allocation4 + $0xc8] sm:$0xff]
    %v201 = vld [vmem:[#allocation4 + $0xd0] sm:$0xff]
    %v202 = vld [vmem:[#allocation4 + $0xd8] sm:$0xff]
    %v203 = vld [vmem:[#allocation4 + $0xe0] sm:$0xff]
    %v204 = vld [vmem:[#allocation4 + $0xe8] sm:$0xff]
    %v205 = vld [vmem:[#allocation4 + $0xf0] sm:$0xff]
    %v206 = vld [vmem:[#allocation4 + $0xf8] sm:$0xff]
    %v207 = vld [vmem:[#allocation4 + $0x100] sm:$0xff]
    %v208 = vld [vmem:[#allocation4 + $0x108] sm:$0xff]
    %v209 = vld [vmem:[#allocation4 + $0x110] sm:$0xff]
    %v210 = vld [vmem:[#allocation4 + $0x118] sm:$0xff]
    %v211 = vld [vmem:[#allocation4 + $0x120] sm:$0xff]
    %v212 = vld [vmem:[#allocation4 + $0x128] sm:$0xff]
    %v213 = vld [vmem:[#allocation4 + $0x130] sm:$0xff]
    %v214 = vld [vmem:[#allocation4 + $0x138] sm:$0xff]
    %v215 = vld [vmem:[#allocation7] sm:$0x1]
    %v216 = vld [vmem:[#allocation7 + $0x1] sm:$0x3]
    %v217 = vld [vmem:[#allocation7 + $0x3] sm:$0x1]
    %v219 = vperm.slane %v215, 0
    %vm221 = vcmask 523264
    %v223 = vsel %vm221, %v174, 0
    %225 = vmatpush.msra.mxu0 0.0
    %226 = vmatpush.msra.mxu0 0.0
    %227 = vmatpush.msra.mxu0 0.0
    %228 = vmatpush.msra.mxu0 0.0
    %229 = vmatpush.msra.mxu0 0.0
    %230 = vmatpush.msra.mxu0 0.0
    %231 = vmatpush.msra.mxu0 0.0
    %232 = vmatpush.msra.mxu0 0.0
    %233 = vmatpush.msra.mxu0 %v182
    %234 = vmatpush.msra.mxu0 %v181
    %235 = vmatpush.msra.mxu0 %v180
    %236 = vmatpush.msra.mxu0 %v179
    %237 = vmatpush.msra.mxu0 %v178
    %238 = vmatpush.msra.mxu0 %v177
    %239 = vmatpush.msra.mxu0 %v176
    %240 = vmatpush.msra.mxu0 %v175
    %241 = vmatmul.f32.gmra.mxu0 %v223
    %v242 = vpop.f32.mrf.mxu0
    %v243 = vadd.f32 %v219, %v242
    %244 = vdwg.mxu0
    %v245 = vmax.f32 %v243, 0.0
    %v246 = vld [vmem:[#allocation6] sm:$0xff]
    %v247 = vld [vmem:[#allocation6 + $0x8] sm:$0xff]
    %v248 = vld [vmem:[#allocation6 + $0x10] sm:$0xff]
    %v249 = vld [vmem:[#allocation6 + $0x18] sm:$0xff]
    %v250 = vld [vmem:[#allocation6 + $0x20] sm:$0xff]
    %v251 = vld [vmem:[#allocation6 + $0x28] sm:$0xff]
    %v252 = vld [vmem:[#allocation6 + $0x30] sm:$0xff]
    %v253 = vld [vmem:[#allocation6 + $0x38] sm:$0xff]
    %v254 = vld [vmem:[#allocation6 + $0x40] sm:$0xff]
    %v255 = vld [vmem:[#allocation6 + $0x48] sm:$0xff]
    %v256 = vld [vmem:[#allocation6 + $0x50] sm:$0xff]
    %v257 = vld [vmem:[#allocation6 + $0x58] sm:$0xff]
    %v258 = vld [vmem:[#allocation6 + $0x60] sm:$0xff]
    %v259 = vld [vmem:[#allocation6 + $0x68] sm:$0xff]
    %v260 = vld [vmem:[#allocation6 + $0x70] sm:$0xff]
    %v261 = vld [vmem:[#allocation6 + $0x78] sm:$0xff]
    %v262 = vld [vmem:[#allocation6 + $0x80] sm:$0xff]
    %v263 = vld [vmem:[#allocation6 + $0x88] sm:$0xff]
    %v264 = vld [vmem:[#allocation6 + $0x90] sm:$0xff]
    %v265 = vld [vmem:[#allocation6 + $0x98] sm:$0xff]
    %v266 = vld [vmem:[#allocation6 + $0xa0] sm:$0xff]
    %v267 = vld [vmem:[#allocation6 + $0xa8] sm:$0xff]
    %v268 = vld [vmem:[#allocation6 + $0xb0] sm:$0xff]
    %v269 = vld [vmem:[#allocation6 + $0xb8] sm:$0xff]
    %v270 = vld [vmem:[#allocation6 + $0xc0] sm:$0xff]
    %v271 = vld [vmem:[#allocation6 + $0xc8] sm:$0xff]
    %v272 = vld [vmem:[#allocation6 + $0xd0] sm:$0xff]
    %v273 = vld [vmem:[#allocation6 + $0xd8] sm:$0xff]
    %v274 = vld [vmem:[#allocation6 + $0xe0] sm:$0xff]
    %v275 = vld [vmem:[#allocation6 + $0xe8] sm:$0xff]
    %v276 = vld [vmem:[#allocation6 + $0xf0] sm:$0xff]
    %v277 = vld [vmem:[#allocation6 + $0xf8] sm:$0xff]
    %v279 = vperm.slane %v216, 0
    %v280 = vperm.slane %v216, 1
    %283 = vmatpush.msra.mxu0 %v276
    %284 = vmatpush.msra.mxu0 %v274
    %285 = vmatpush.msra.mxu0 %v272
    %286 = vmatpush.msra.mxu0 %v270
    %287 = vmatpush.msra.mxu0 %v268
    %288 = vmatpush.msra.mxu0 %v266
    %289 = vmatpush.msra.mxu0 %v264
    %290 = vmatpush.msra.mxu0 %v262
    %291 = vmatpush.msra.mxu0 %v260
    %292 = vmatpush.msra.mxu0 %v258
    %293 = vmatpush.msra.mxu0 %v256
    %294 = vmatpush.msra.mxu0 %v254
    %295 = vmatpush.msra.mxu0 %v252
    %296 = vmatpush.msra.mxu0 %v250
    %297 = vmatpush.msra.mxu0 %v248
    %298 = vmatpush.msra.mxu0 %v246
    %299 = vmatmul.f32.gmra.mxu0 %v245
    %v300 = vpop.f32.mrf.mxu0
    %v301 = vadd.f32 %v279, %v300
    %302 = vdwg.mxu0
    %303 = vmatpush.msra.mxu0 %v277
    %304 = vmatpush.msra.mxu0 %v275
    %305 = vmatpush.msra.mxu0 %v273
    %306 = vmatpush.msra.mxu0 %v271
    %307 = vmatpush.msra.mxu0 %v269
    %308 = vmatpush.msra.mxu0 %v267
    %309 = vmatpush.msra.mxu0 %v265
    %310 = vmatpush.msra.mxu0 %v263
    %311 = vmatpush.msra.mxu0 %v261
    %312 = vmatpush.msra.mxu0 %v259
    %313 = vmatpush.msra.mxu0 %v257
    %314 = vmatpush.msra.mxu0 %v255
    %315 = vmatpush.msra.mxu0 %v253
    %316 = vmatpush.msra.mxu0 %v251
    %317 = vmatpush.msra.mxu0 %v249
    %318 = vmatpush.msra.mxu0 %v247
    %319 = vmatmul.f32.gmra.mxu0 %v245
    %v320 = vpop.f32.mrf.mxu0
    %v321 = vadd.f32 %v280, %v320
    %322 = vdwg.mxu0
    %v323 = vmax.f32 %v301, 0.0
    %v324 = vmax.f32 %v321, 0.0
    %v326 = vperm.slane %v217, 0
    %328 = vmatpush.msra.mxu0 %v198
    %329 = vmatpush.msra.mxu0 %v197
    %330 = vmatpush.msra.mxu0 %v196
    %331 = vmatpush.msra.mxu0 %v195
    %332 = vmatpush.msra.mxu0 %v194
    %333 = vmatpush.msra.mxu0 %v193
    %334 = vmatpush.msra.mxu0 %v192
    %335 = vmatpush.msra.mxu0 %v191
    %336 = vmatpush.msra.mxu0 %v190
    %337 = vmatpush.msra.mxu0 %v189
    %338 = vmatpush.msra.mxu0 %v188
    %339 = vmatpush.msra.mxu0 %v187
    %340 = vmatpush.msra.mxu0 %v186
    %341 = vmatpush.msra.mxu0 %v185
    %342 = vmatpush.msra.mxu0 %v184
    %343 = vmatpush.msra.mxu0 %v183
    %344 = vmatmul.f32.gmra.mxu0 %v323
    %v345 = vpop.f32.mrf.mxu0
    %v346 = vadd.f32 %v326, %v345
    %347 = vdwg.mxu0
    %348 = vmatpush.msra.mxu0 %v214
    %349 = vmatpush.msra.mxu0 %v213
    %350 = vmatpush.msra.mxu0 %v212
    %351 = vmatpush.msra.mxu0 %v211
    %352 = vmatpush.msra.mxu0 %v210
    %353 = vmatpush.msra.mxu0 %v209
    %354 = vmatpush.msra.mxu0 %v208
    %355 = vmatpush.msra.mxu0 %v207
    %356 = vmatpush.msra.mxu0 %v206
    %357 = vmatpush.msra.mxu0 %v205
    %358 = vmatpush.msra.mxu0 %v204
    %359 = vmatpush.msra.mxu0 %v203
    %360 = vmatpush.msra.mxu0 %v202
    %361 = vmatpush.msra.mxu0 %v201
    %362 = vmatpush.msra.mxu0 %v200
    %363 = vmatpush.msra.mxu0 %v199
    %364 = vmatmul.f32.gmra.mxu0 %v324
    %v365 = vpop.f32.mrf.mxu0
    %v366 = vadd.f32 %v346, %v365
    %367 = vdwg.mxu0
    %368 = vst [vmem:[%s4] sm:$0xff] %v366
    // Predicated region
    $region34: #{head.1} parent=1 // pred_check
      _
    $region35: #{head.1} parent=1 // pred_check_branch
      %370 = sbr.rel (0) target = $region37
    $region36: #{head.1} parent=1 // pred_region
      _
    $region37: #{head.1} parent=1 // pred_fallthru
      _
    // Predicated region
    $region38: #{head.1} parent=1 // pred_check
      _
    $region39: #{head.1} parent=1 // pred_check_branch
      %372 = sbr.rel (0) target = $region41
    $region40: #{head.1} parent=1 // pred_region
      _
    $region41: #{head.1} parent=1 // pred_fallthru
      _
    %373 = vsyncpa [#allocation3], 1
    %374 = vsyncpa [#allocation5], 1
    %375 = vsyncpa [#allocation8], 1

</llo_original>
